<compile_context>
chip_gen: v6e
topology: v6e:2x2x1
jax: 0.10.0
libtpu: 0.0.40
codegen_flags: <defaults>
</compile_context>

<pallas_src>
import functools

import jax
import jax.numpy as jnp
import numpy as np
from jax import lax
from jax.experimental import pallas as pl
from jax.experimental.pallas import tpu as pltpu


def _cdiv(a, b):
    return -(-a // b)


def _round_up(x, m):
    return _cdiv(x, m) * m


def _num_tensorcores_per_chip():
    """Best-effort TensorCores-per-chip detection (v7x has 2). Correctness-neutral."""
    try:
        kind = jax.devices()[0].device_kind.lower()
    except Exception:
        return 1
    return 2 if "7" in kind else 1


def _plan_k_layout(sizes):
    """Bin-pack the vocab fields into 128-wide K tiles (within one packing slot).

    Returns (slot_k, field_slot_off, field_local_off, tile_fields):
      slot_k          : K rows occupied by one packing slot (multiple of 128)
      field_slot_off  : per-field row offset within the slot (for the fused table)
      field_local_off : per-field offset added to raw ids wrapper-side (tile-local)
      tile_fields     : per within-slot tile: tuple of (field_idx, compare_base)
    """
    nf = len(sizes)
    order = sorted(range(nf), key=lambda i: -sizes[i])
    bins = []           # each: [used, [(field, off_in_bin)]]
    big_fields = []     # fields with vocab > 128 get their own tiles
    for f in order:
        sz = sizes[f]
        if sz > 128:
            big_fields.append(f)
            continue
        for b in bins:
            if b[0] + sz <= 128:
                b[1].append((f, b[0]))
                b[0] += sz
                break
        else:
            bins.append([sz, [(f, 0)]])

    field_slot_off = [0] * nf
    field_local_off = [0] * nf
    tile_fields = []
    for bi, (_, members) in enumerate(bins):
        tile_fields.append(tuple((f, 0) for f, _ in members))
        for f, off in members:
            field_slot_off[f] = bi * 128 + off
            field_local_off[f] = off
    next_tile = len(bins)
    for f in big_fields:
        ntiles = _cdiv(sizes[f], 128)
        field_slot_off[f] = next_tile * 128
        field_local_off[f] = 0
        for k in range(ntiles):
            tile_fields.append(((f, k * 128),))
        next_tile += ntiles
    slot_k = next_tile * 128
    return slot_k, field_slot_off, field_local_off, tuple(tile_fields)


def _lpbert_embed_kernel(*refs, eps, tile_col_specs, use_seg_matmul):
    """One grid step: TG packed rows.

    refs (in order): ids, w_big, [seg], gamma, beta, out, onehot_scratch
      ids    : (TG, 4*packing) int32, tile-local ids
      w_big  : (K, L) f32, fused table (block-diagonal over slots and fields)
      seg    : (L, L) f32, per-embed-segment averaging matrix (packing > 1 only)
      gamma/beta : (1, L) f32 LayerNorm affine (tiled over packed slots)
      out    : (TG, L) f32 lane-dense output block
      onehot : (TG, K) f32 VMEM scratch
    """
    if use_seg_matmul:
        ids_ref, w_ref, seg_ref, gamma_ref, beta_ref, out_ref, onehot_ref = refs
    else:
        ids_ref, w_ref, gamma_ref, beta_ref, out_ref, onehot_ref = refs
        seg_ref = None

    ids = ids_ref[...]
    tg = out_ref.shape[0]
    iota = lax.broadcasted_iota(jnp.int32, (tg, 128), 1)

    # Tile-restricted one-hot: each 128-wide K tile compares only the id columns
    # whose vocab range lands in it.  Ranges are disjoint -> boolean OR + one
    # convert per tile.  Out-of-range ids silently contribute zero rows
    # (PyTorch's nn.Embedding would raise).
    for t, cols in enumerate(tile_col_specs):
        hit = None
        for c, base in cols:
            target = ids[:, c:c + 1]
            if base:
                target = target - base
            h = iota == target
            hit = h if hit is None else (hit | h)
        onehot_ref[:, t * 128:(t + 1) * 128] = hit.astype(jnp.float32)

    # Single fused MXU lookup: all 4 fields of all packed tokens in one matmul.
    emb = jnp.dot(onehot_ref[...], w_ref[...], preferred_element_type=jnp.float32)

    # LayerNorm over each embed segment (eps=1e-6, biased variance).
    if use_seg_matmul:
        # Several tokens share one 128-lane row -> segmented reduction via a
        # block-diagonal averaging matmul.  E[x^2]-mean^2 keeps the two matmuls
        # independent (better ILP); MXU has plenty of slack.
        mean = jnp.dot(emb, seg_ref[...], preferred_element_type=jnp.float32)
        ex2 = jnp.dot(emb * emb, seg_ref[...], preferred_element_type=jnp.float32)
        var = ex2 - mean * mean
    else:
        mean = jnp.mean(emb, axis=-1, keepdims=True)
        var = jnp.mean(emb * emb, axis=-1, keepdims=True) - mean * mean

    inv = lax.rsqrt(var + eps)
    out_ref[...] = (emb - mean) * inv * gamma_ref[...] + beta_ref[...]


class LPBERTEmbedding:
    """LP-BERT embedding forward (eval mode) with a Pallas TPU kernel.

    All kernel constants (fused table, segment matrix, gamma/beta, id offsets)
    are built once here, not per forward call.
    """

    def __init__(self, params, *, eps=1e-6, target_tile_rows=512):
        self.eps = float(eps)
        self.target_tile_rows = int(target_tile_rows)
        self._ncores = _num_tensorcores_per_chip()

        tables = [np.asarray(params["w_day"], np.float32),
                  np.asarray(params["w_time"], np.float32),
                  np.asarray(params["w_loc"], np.float32),
                  np.asarray(params["w_td"], np.float32)]
        e = tables[0].shape[1]
        sizes = [t.shape[0] for t in tables]

        # Lane packing: P tokens share one 128-lane output row when E < 128.
        packing = 128 // e if (e < 128 and 128 % e == 0) else 1
        lanes = packing * e
        self.embed_size = e
        self.packing = packing
        self.lanes = lanes

        slot_k, field_slot_off, field_local_off, tile_fields = _plan_k_layout(sizes)
        kdim = packing * slot_k
        self.kdim = kdim

        # Global K tile -> ((ids column, compare base), ...).  Column order per
        # packed row is slot-major, then field order (day, time, loc, td).
        tiles_per_slot = slot_k // 128
        specs = []
        for j in range(packing):
            for t in range(tiles_per_slot):
                specs.append(tuple((j * 4 + f, base) for f, base in tile_fields[t]))
        self.tile_col_specs = tuple(specs)

        # Fused table: block-diagonal over packing slots (lane segments) and over
        # fields (row segments), every slot padded to full 128-row K tiles.
        w_big = np.zeros((kdim, lanes), np.float32)
        for j in range(packing):
            for f, tbl in enumerate(tables):
                r0 = j * slot_k + field_slot_off[f]
                w_big[r0:r0 + tbl.shape[0], j * e:(j + 1) * e] = tbl
        self.w_big = jnp.asarray(w_big)

        # Segment-averaging matrix for the segmented LayerNorm reduction.
        if packing > 1:
            seg_id = np.arange(lanes) // e
            seg = (seg_id[:, None] == seg_id[None, :]).astype(np.float32) / e
            self.seg = jnp.asarray(seg)
        else:
            self.seg = None

        gamma = np.tile(np.asarray(params["gamma"], np.float32).reshape(1, e), (1, packing))
        beta = np.tile(np.asarray(params["beta"], np.float32).reshape(1, e), (1, packing))
        self.gamma = jnp.asarray(gamma)
        self.beta = jnp.asarray(beta)

        self._local_off = jnp.asarray(field_local_off, jnp.int32)

    def __call__(self, day_ids, time_ids, location_ids, timedelta_ids):
        b, s = day_ids.shape
        n = b * s
        e, packing, lanes = self.embed_size, self.packing, self.lanes
        num_cols = 4 * packing

        # Grid sizing: ~target_tile_rows packed rows per step; step count rounded
        # to a multiple of the TC count (even for v7x megacore balance, a single
        # step allowed on single-TC v5e/v6e).
        g = _cdiv(n, packing)
        steps = max(1, _cdiv(g, self.target_tile_rows))
        if self._ncores > 1:
            steps = _round_up(steps, self._ncores)
        tg = _round_up(_cdiv(g, steps), 8)
        g_pad = steps * tg
        n_pad = g_pad * packing

        # Pack the four id streams into one (N, 4) tensor (one DMA stream per grid
        # step) with the tile-local offsets pre-added.  Pad tokens (id 0) only write
        # their own lane segment, so they never corrupt real tokens in the same row.
        ids_all = jnp.stack([day_ids, time_ids, location_ids, timedelta_ids], axis=-1)
        ids_all = ids_all.reshape(n, 4).astype(jnp.int32)
        ids_all = jnp.pad(ids_all, ((0, n_pad - n), (0, 0)))
        ids_packed = (ids_all + self._local_off[None, :]).reshape(g_pad, num_cols)

        use_seg = packing > 1
        operands = [ids_packed, self.w_big]
        in_specs = [
            pl.BlockSpec((tg, num_cols), lambda i: (i, 0)),     # ids: one DMA/step
            pl.BlockSpec(self.w_big.shape, lambda i: (0, 0)),   # constant fused table
        ]
        if use_seg:
            operands.append(self.seg)
            in_specs.append(pl.BlockSpec(self.seg.shape, lambda i: (0, 0)))
        operands += [self.gamma, self.beta]
        in_specs += [pl.BlockSpec(self.gamma.shape, lambda i: (0, 0)),
                     pl.BlockSpec(self.beta.shape, lambda i: (0, 0))]

        out = pl.pallas_call(
            functools.partial(_lpbert_embed_kernel, eps=self.eps,
                              tile_col_specs=self.tile_col_specs,
                              use_seg_matmul=use_seg),
            out_shape=jax.ShapeDtypeStruct((g_pad, lanes), jnp.float32),
            grid_spec=pltpu.PrefetchScalarGridSpec(
                num_scalar_prefetch=0,
                grid=(steps,),
                in_specs=in_specs,
                out_specs=pl.BlockSpec((tg, lanes), lambda i: (i, 0)),
                scratch_shapes=[pltpu.VMEM((tg, self.kdim), jnp.float32)],
            ),
            compiler_params=pltpu.CompilerParams(
                dimension_semantics=("parallel",),
                vmem_limit_bytes=32 * 1024 * 1024),
        )(*operands)

        # Un-pack lanes back to one token per row, drop padding, restore (B, S, E).
        return out.reshape(g_pad * packing, e)[:n].reshape(b, s, e)


def init_params(key, config):
    """Deterministic parameter init mirroring the module's _init_weights (N(0, 0.02))."""
    e = config["embed_size"]
    k1, k2, k3, k4 = jax.random.split(key, 4)
    return {
        "w_day": 0.02 * jax.random.normal(k1, (config["max_days"], e), jnp.float32),
        "w_time": 0.02 * jax.random.normal(k2, (config["max_times"], e), jnp.float32),
        "w_loc": 0.02 * jax.random.normal(k3, (config["max_locations"], e), jnp.float32),
        "w_td": 0.02 * jax.random.normal(k4, (config["max_timedelta"], e), jnp.float32),
        "gamma": jnp.ones((e,), jnp.float32),   # nn.LayerNorm default weight
        "beta": jnp.zeros((e,), jnp.float32),   # nn.LayerNorm default bias
    }


def reference_forward(day_ids, time_ids, location_ids, timedelta_ids, params, eps=1e-6):
    """Pure-JAX reference (mirrors the PyTorch forward in eval mode)."""
    emb = (params["w_day"][day_ids]
           + params["w_time"][time_ids]
           + params["w_loc"][location_ids]
           + params["w_td"][timedelta_ids])
    mean = jnp.mean(emb, axis=-1, keepdims=True)
    var = jnp.mean((emb - mean) ** 2, axis=-1, keepdims=True)
    normed = (emb - mean) / jnp.sqrt(var + eps)
    return normed * params["gamma"] + params["beta"]


if __name__ == "__main__":
    config = {
        "embed_size": 32,
        "max_days": 8,
        "max_times": 48,
        "max_locations": 64,
        "max_timedelta": 16,
        "dropout": 0.1,
    }
    B, S = 2, 8

    key = jax.random.PRNGKey(0)
    kp, kd, kt, kl, ktd = jax.random.split(key, 5)
    params = init_params(kp, config)

    day_ids = jax.random.randint(kd, (B, S), 0, config["max_days"], dtype=jnp.int32)
    time_ids = jax.random.randint(kt, (B, S), 0, config["max_times"], dtype=jnp.int32)
    location_ids = jax.random.randint(kl, (B, S), 0, config["max_locations"], dtype=jnp.int32)
    timedelta_ids = jax.random.randint(ktd, (B, S), 0, config["max_timedelta"], dtype=jnp.int32)

    embedding = LPBERTEmbedding(params)   # constants built once, reused per call
    out = embedding(day_ids, time_ids, location_ids, timedelta_ids)
    out = jax.block_until_ready(out)

    ref = reference_forward(day_ids, time_ids, location_ids, timedelta_ids, params)
    np.testing.assert_allclose(np.asarray(out), np.asarray(ref), rtol=1e-5, atol=1e-5)

    print("KERNEL_OK")
</pallas_src>

<mosaic_0001>
module attributes {stable_mosaic.version = 11 : i64} {
  func.func @_lpbert_embed_kernel(%arg0: i32, %arg1: memref<8x16xi32, #tpu.memory_space<vmem>>, %arg2: memref<1024x128xf32, #tpu.memory_space<vmem>>, %arg3: memref<128x128xf32, #tpu.memory_space<vmem>>, %arg4: memref<1x128xf32, #tpu.memory_space<vmem>>, %arg5: memref<1x128xf32, #tpu.memory_space<vmem>>, %arg6: memref<8x128xf32, #tpu.memory_space<vmem>>, %arg7: memref<8x1024xf32, #tpu.memory_space<vmem>>) attributes {dimension_semantics = [#tpu.dimension_semantics<parallel>], iteration_bounds = array<i64: 1>, scalar_prefetch = 0 : i64, scratch_operands = 1 : i64, tpu.core_type = #tpu.core_type<tc>, window_params = [{transform_indices = @transform_0, window_bounds = array<i64: 8, 16>}, {pipeline_mode = #tpu.pipeline_mode<synchronous>, transform_indices = @transform_1, window_bounds = array<i64: 1024, 128>}, {pipeline_mode = #tpu.pipeline_mode<synchronous>, transform_indices = @transform_2, window_bounds = array<i64: 128, 128>}, {pipeline_mode = #tpu.pipeline_mode<synchronous>, transform_indices = @transform_3, window_bounds = array<i64: 1, 128>}, {pipeline_mode = #tpu.pipeline_mode<synchronous>, transform_indices = @transform_4, window_bounds = array<i64: 1, 128>}, {transform_indices = @transform_5, window_bounds = array<i64: 8, 128>}]} {
    %c0 = arith.constant 0 : index
    %c0_0 = arith.constant 0 : index
    %0 = vector.load %arg1[%c0, %c0_0] : memref<8x16xi32, #tpu.memory_space<vmem>>, vector<8x16xi32>
    %1 = tpu.iota {dimensions = array<i32: 1>} : vector<8x128xi32>
    %2 = vector.extract_strided_slice %0 {offsets = [0, 2], sizes = [8, 1], strides = [1, 1]} : vector<8x16xi32> to vector<8x1xi32>
    %3 = vector.broadcast %2 : vector<8x1xi32> to vector<8x128xi32>
    %4 = arith.cmpi eq, %1, %3 : vector<8x128xi32>
    %5 = vector.extract_strided_slice %0 {offsets = [0, 1], sizes = [8, 1], strides = [1, 1]} : vector<8x16xi32> to vector<8x1xi32>
    %6 = vector.broadcast %5 : vector<8x1xi32> to vector<8x128xi32>
    %7 = arith.cmpi eq, %1, %6 : vector<8x128xi32>
    %8 = arith.ori %4, %7 : vector<8x128xi1>
    %9 = vector.extract_strided_slice %0 {offsets = [0, 3], sizes = [8, 1], strides = [1, 1]} : vector<8x16xi32> to vector<8x1xi32>
    %10 = vector.broadcast %9 : vector<8x1xi32> to vector<8x128xi32>
    %11 = arith.cmpi eq, %1, %10 : vector<8x128xi32>
    %12 = arith.ori %8, %11 : vector<8x128xi1>
    %13 = arith.extui %12 : vector<8x128xi1> to vector<8x128xi32>
    %14 = arith.sitofp %13 : vector<8x128xi32> to vector<8x128xf32>
    %c0_1 = arith.constant 0 : index
    %c0_2 = arith.constant 0 : index
    %15 = vector.load %arg7[%c0_1, %c0_2] : memref<8x1024xf32, #tpu.memory_space<vmem>>, vector<8x128xf32>
    tpu.vector_store %arg7[%c0_1, %c0_2], %14 {strides = array<i32>} : memref<8x1024xf32, #tpu.memory_space<vmem>>, vector<8x128xf32>,
    %16 = vector.extract_strided_slice %0 {offsets = [0, 0], sizes = [8, 1], strides = [1, 1]} : vector<8x16xi32> to vector<8x1xi32>
    %17 = vector.broadcast %16 : vector<8x1xi32> to vector<8x128xi32>
    %18 = arith.cmpi eq, %1, %17 : vector<8x128xi32>
    %19 = arith.extui %18 : vector<8x128xi1> to vector<8x128xi32>
    %20 = arith.sitofp %19 : vector<8x128xi32> to vector<8x128xf32>
    %c0_3 = arith.constant 0 : index
    %c128 = arith.constant 128 : index
    %21 = vector.load %arg7[%c0_3, %c128] : memref<8x1024xf32, #tpu.memory_space<vmem>>, vector<8x128xf32>
    tpu.vector_store %arg7[%c0_3, %c128], %20 {strides = array<i32>} : memref<8x1024xf32, #tpu.memory_space<vmem>>, vector<8x128xf32>,
    %22 = vector.extract_strided_slice %0 {offsets = [0, 6], sizes = [8, 1], strides = [1, 1]} : vector<8x16xi32> to vector<8x1xi32>
    %23 = vector.broadcast %22 : vector<8x1xi32> to vector<8x128xi32>
    %24 = arith.cmpi eq, %1, %23 : vector<8x128xi32>
    %25 = vector.extract_strided_slice %0 {offsets = [0, 5], sizes = [8, 1], strides = [1, 1]} : vector<8x16xi32> to vector<8x1xi32>
    %26 = vector.broadcast %25 : vector<8x1xi32> to vector<8x128xi32>
    %27 = arith.cmpi eq, %1, %26 : vector<8x128xi32>
    %28 = arith.ori %24, %27 : vector<8x128xi1>
    %29 = vector.extract_strided_slice %0 {offsets = [0, 7], sizes = [8, 1], strides = [1, 1]} : vector<8x16xi32> to vector<8x1xi32>
    %30 = vector.broadcast %29 : vector<8x1xi32> to vector<8x128xi32>
    %31 = arith.cmpi eq, %1, %30 : vector<8x128xi32>
    %32 = arith.ori %28, %31 : vector<8x128xi1>
    %33 = arith.extui %32 : vector<8x128xi1> to vector<8x128xi32>
    %34 = arith.sitofp %33 : vector<8x128xi32> to vector<8x128xf32>
    %c0_4 = arith.constant 0 : index
    %c256 = arith.constant 256 : index
    %35 = vector.load %arg7[%c0_4, %c256] : memref<8x1024xf32, #tpu.memory_space<vmem>>, vector<8x128xf32>
    tpu.vector_store %arg7[%c0_4, %c256], %34 {strides = array<i32>} : memref<8x1024xf32, #tpu.memory_space<vmem>>, vector<8x128xf32>,
    %36 = vector.extract_strided_slice %0 {offsets = [0, 4], sizes = [8, 1], strides = [1, 1]} : vector<8x16xi32> to vector<8x1xi32>
    %37 = vector.broadcast %36 : vector<8x1xi32> to vector<8x128xi32>
    %38 = arith.cmpi eq, %1, %37 : vector<8x128xi32>
    %39 = arith.extui %38 : vector<8x128xi1> to vector<8x128xi32>
    %40 = arith.sitofp %39 : vector<8x128xi32> to vector<8x128xf32>
    %c0_5 = arith.constant 0 : index
    %c384 = arith.constant 384 : index
    %41 = vector.load %arg7[%c0_5, %c384] : memref<8x1024xf32, #tpu.memory_space<vmem>>, vector<8x128xf32>
    tpu.vector_store %arg7[%c0_5, %c384], %40 {strides = array<i32>} : memref<8x1024xf32, #tpu.memory_space<vmem>>, vector<8x128xf32>,
    %42 = vector.extract_strided_slice %0 {offsets = [0, 10], sizes = [8, 1], strides = [1, 1]} : vector<8x16xi32> to vector<8x1xi32>
    %43 = vector.broadcast %42 : vector<8x1xi32> to vector<8x128xi32>
    %44 = arith.cmpi eq, %1, %43 : vector<8x128xi32>
    %45 = vector.extract_strided_slice %0 {offsets = [0, 9], sizes = [8, 1], strides = [1, 1]} : vector<8x16xi32> to vector<8x1xi32>
    %46 = vector.broadcast %45 : vector<8x1xi32> to vector<8x128xi32>
    %47 = arith.cmpi eq, %1, %46 : vector<8x128xi32>
    %48 = arith.ori %44, %47 : vector<8x128xi1>
    %49 = vector.extract_strided_slice %0 {offsets = [0, 11], sizes = [8, 1], strides = [1, 1]} : vector<8x16xi32> to vector<8x1xi32>
    %50 = vector.broadcast %49 : vector<8x1xi32> to vector<8x128xi32>
    %51 = arith.cmpi eq, %1, %50 : vector<8x128xi32>
    %52 = arith.ori %48, %51 : vector<8x128xi1>
    %53 = arith.extui %52 : vector<8x128xi1> to vector<8x128xi32>
    %54 = arith.sitofp %53 : vector<8x128xi32> to vector<8x128xf32>
    %c0_6 = arith.constant 0 : index
    %c512 = arith.constant 512 : index
    %55 = vector.load %arg7[%c0_6, %c512] : memref<8x1024xf32, #tpu.memory_space<vmem>>, vector<8x128xf32>
    tpu.vector_store %arg7[%c0_6, %c512], %54 {strides = array<i32>} : memref<8x1024xf32, #tpu.memory_space<vmem>>, vector<8x128xf32>,
    %56 = vector.extract_strided_slice %0 {offsets = [0, 8], sizes = [8, 1], strides = [1, 1]} : vector<8x16xi32> to vector<8x1xi32>
    %57 = vector.broadcast %56 : vector<8x1xi32> to vector<8x128xi32>
    %58 = arith.cmpi eq, %1, %57 : vector<8x128xi32>
    %59 = arith.extui %58 : vector<8x128xi1> to vector<8x128xi32>
    %60 = arith.sitofp %59 : vector<8x128xi32> to vector<8x128xf32>
    %c0_7 = arith.constant 0 : index
    %c640 = arith.constant 640 : index
    %61 = vector.load %arg7[%c0_7, %c640] : memref<8x1024xf32, #tpu.memory_space<vmem>>, vector<8x128xf32>
    tpu.vector_store %arg7[%c0_7, %c640], %60 {strides = array<i32>} : memref<8x1024xf32, #tpu.memory_space<vmem>>, vector<8x128xf32>,
    %62 = vector.extract_strided_slice %0 {offsets = [0, 14], sizes = [8, 1], strides = [1, 1]} : vector<8x16xi32> to vector<8x1xi32>
    %63 = vector.broadcast %62 : vector<8x1xi32> to vector<8x128xi32>
    %64 = arith.cmpi eq, %1, %63 : vector<8x128xi32>
    %65 = vector.extract_strided_slice %0 {offsets = [0, 13], sizes = [8, 1], strides = [1, 1]} : vector<8x16xi32> to vector<8x1xi32>
    %66 = vector.broadcast %65 : vector<8x1xi32> to vector<8x128xi32>
    %67 = arith.cmpi eq, %1, %66 : vector<8x128xi32>
    %68 = arith.ori %64, %67 : vector<8x128xi1>
    %69 = vector.extract_strided_slice %0 {offsets = [0, 15], sizes = [8, 1], strides = [1, 1]} : vector<8x16xi32> to vector<8x1xi32>
    %70 = vector.broadcast %69 : vector<8x1xi32> to vector<8x128xi32>
    %71 = arith.cmpi eq, %1, %70 : vector<8x128xi32>
    %72 = arith.ori %68, %71 : vector<8x128xi1>
    %73 = arith.extui %72 : vector<8x128xi1> to vector<8x128xi32>
    %74 = arith.sitofp %73 : vector<8x128xi32> to vector<8x128xf32>
    %c0_8 = arith.constant 0 : index
    %c768 = arith.constant 768 : index
    %75 = vector.load %arg7[%c0_8, %c768] : memref<8x1024xf32, #tpu.memory_space<vmem>>, vector<8x128xf32>
    tpu.vector_store %arg7[%c0_8, %c768], %74 {strides = array<i32>} : memref<8x1024xf32, #tpu.memory_space<vmem>>, vector<8x128xf32>,
    %76 = vector.extract_strided_slice %0 {offsets = [0, 12], sizes = [8, 1], strides = [1, 1]} : vector<8x16xi32> to vector<8x1xi32>
    %77 = vector.broadcast %76 : vector<8x1xi32> to vector<8x128xi32>
    %78 = arith.cmpi eq, %1, %77 : vector<8x128xi32>
    %79 = arith.extui %78 : vector<8x128xi1> to vector<8x128xi32>
    %80 = arith.sitofp %79 : vector<8x128xi32> to vector<8x128xf32>
    %c0_9 = arith.constant 0 : index
    %c896 = arith.constant 896 : index
    %81 = vector.load %arg7[%c0_9, %c896] : memref<8x1024xf32, #tpu.memory_space<vmem>>, vector<8x128xf32>
    tpu.vector_store %arg7[%c0_9, %c896], %80 {strides = array<i32>} : memref<8x1024xf32, #tpu.memory_space<vmem>>, vector<8x128xf32>,
    %c0_10 = arith.constant 0 : index
    %c0_11 = arith.constant 0 : index
    %82 = vector.load %arg7[%c0_10, %c0_11] : memref<8x1024xf32, #tpu.memory_space<vmem>>, vector<8x1024xf32>
    %c0_12 = arith.constant 0 : index
    %c0_13 = arith.constant 0 : index
    %83 = vector.load %arg2[%c0_12, %c0_13] : memref<1024x128xf32, #tpu.memory_space<vmem>>, vector<1024x128xf32>
    %cst = arith.constant dense<0.000000e+00> : vector<8x128xf32>
    %84 = tpu.matmul %82, %83, %cst {dimension_numbers = #tpu.dot_dimension_numbers<[1], [0], [0], [1], [0, 0, 1, 1], [], []>} : vector<8x1024xf32>, vector<1024x128xf32>, vector<8x128xf32> -> vector<8x128xf32>
    %c0_14 = arith.constant 0 : index
    %c0_15 = arith.constant 0 : index
    %85 = vector.load %arg3[%c0_14, %c0_15] : memref<128x128xf32, #tpu.memory_space<vmem>>, vector<128x128xf32>
    %cst_16 = arith.constant dense<0.000000e+00> : vector<8x128xf32>
    %86 = tpu.matmul %84, %85, %cst_16 {dimension_numbers = #tpu.dot_dimension_numbers<[1], [0], [0], [1], [0, 0, 1, 1], [], []>} : vector<8x128xf32>, vector<128x128xf32>, vector<8x128xf32> -> vector<8x128xf32>
    %87 = arith.mulf %84, %84 : vector<8x128xf32>
    %c0_17 = arith.constant 0 : index
    %c0_18 = arith.constant 0 : index
    %88 = vector.load %arg3[%c0_17, %c0_18] : memref<128x128xf32, #tpu.memory_space<vmem>>, vector<128x128xf32>
    %cst_19 = arith.constant dense<0.000000e+00> : vector<8x128xf32>
    %89 = tpu.matmul %87, %88, %cst_19 {dimension_numbers = #tpu.dot_dimension_numbers<[1], [0], [0], [1], [0, 0, 1, 1], [], []>} : vector<8x128xf32>, vector<128x128xf32>, vector<8x128xf32> -> vector<8x128xf32>
    %90 = arith.mulf %86, %86 : vector<8x128xf32>
    %91 = arith.subf %89, %90 : vector<8x128xf32>
    %cst_20 = arith.constant 9.99999997E-7 : f32
    %92 = vector.broadcast %cst_20 : f32 to vector<8x128xf32>
    %93 = arith.addf %91, %92 : vector<8x128xf32>
    %94 = math.rsqrt %93 : vector<8x128xf32>
    %95 = arith.subf %84, %86 : vector<8x128xf32>
    %96 = arith.mulf %95, %94 : vector<8x128xf32>
    %c0_21 = arith.constant 0 : index
    %c0_22 = arith.constant 0 : index
    %97 = vector.load %arg4[%c0_21, %c0_22] : memref<1x128xf32, #tpu.memory_space<vmem>>, vector<1x128xf32>
    %98 = vector.broadcast %97 : vector<1x128xf32> to vector<8x128xf32>
    %99 = arith.mulf %96, %98 : vector<8x128xf32>
    %c0_23 = arith.constant 0 : index
    %c0_24 = arith.constant 0 : index
    %100 = vector.load %arg5[%c0_23, %c0_24] : memref<1x128xf32, #tpu.memory_space<vmem>>, vector<1x128xf32>
    %101 = vector.broadcast %100 : vector<1x128xf32> to vector<8x128xf32>
    %102 = arith.addf %99, %101 : vector<8x128xf32>
    %c0_25 = arith.constant 0 : index
    %c0_26 = arith.constant 0 : index
    %103 = vector.load %arg6[%c0_25, %c0_26] : memref<8x128xf32, #tpu.memory_space<vmem>>, vector<8x128xf32>
    tpu.vector_store %arg6[%c0_25, %c0_26], %102 {strides = array<i32>} : memref<8x128xf32, #tpu.memory_space<vmem>>, vector<8x128xf32>,
    return
  }
  func.func @transform_0(%arg0: i32) -> (i32, i32) {
    %c0_i32 = arith.constant 0 : i32
    %c0_i32_0 = arith.constant 0 : i32
    return %arg0, %c0_i32 : i32, i32
  }
  func.func @transform_1(%arg0: i32) -> (i32, i32) {
    %c0_i32 = arith.constant 0 : i32
    %c0_i32_0 = arith.constant 0 : i32
    %c0_i32_1 = arith.constant 0 : i32
    return %c0_i32, %c0_i32_0 : i32, i32
  }
  func.func @transform_2(%arg0: i32) -> (i32, i32) {
    %c0_i32 = arith.constant 0 : i32
    %c0_i32_0 = arith.constant 0 : i32
    %c0_i32_1 = arith.constant 0 : i32
    return %c0_i32, %c0_i32_0 : i32, i32
  }
  func.func @transform_3(%arg0: i32) -> (i32, i32) {
    %c0_i32 = arith.constant 0 : i32
    %c0_i32_0 = arith.constant 0 : i32
    %c0_i32_1 = arith.constant 0 : i32
    return %c0_i32, %c0_i32_0 : i32, i32
  }
  func.func @transform_4(%arg0: i32) -> (i32, i32) {
    %c0_i32 = arith.constant 0 : i32
    %c0_i32_0 = arith.constant 0 : i32
    %c0_i32_1 = arith.constant 0 : i32
    return %c0_i32, %c0_i32_0 : i32, i32
  }
  func.func @transform_5(%arg0: i32) -> (i32, i32) {
    %c0_i32 = arith.constant 0 : i32
    %c0_i32_0 = arith.constant 0 : i32
    return %arg0, %c0_i32 : i32, i32
  }
}

</mosaic_0001>

<llo_original>
// kernel: tpu_custom_call.1
$region0: #{tpu_custom_call.1}
  #allocation0 [shape = 'u32[]', space=smem, size = 0x4, offset = 0x4, fixed_abs, tag = 'smem constant byte address 0x4 - core index']
  #allocation1 [shape = 'u32[144,128]{1,0:T(1,128)}', space=vmem, size = 0x12000, scoped, tag = 'internal scratch']
  #allocation2 [shape = 'f32[8,1024]{1,0:T(8,128)}', space=vmem, size = 0x8000, scoped, tag = 'scratch operand']
  %s0 = inlined_call_operand.hbm [shape: s32[8,16], index: 0, kind: input, shape index: {}]
  %s1 = inlined_call_operand.hbm [shape: f32[1024,128], index: 1, kind: input, shape index: {}]
  %s2 = inlined_call_operand.hbm [shape: f32[128,128], index: 2, kind: input, shape index: {}]
  %s3 = inlined_call_operand.vmem [shape: f32[1,128], index: 3, kind: input, shape index: {}]
  %s4 = inlined_call_operand.vmem [shape: f32[1,128], index: 4, kind: input, shape index: {}]
  %s5 = inlined_call_operand.hbm [shape: f32[8,128], index: 5, kind: output, shape index: {}]
  %s6 = sld [smem:[#allocation0]]
  $region42: #{tpu_custom_call.1} parent=0
    _
  %s8 = ssub.s32 1, %s6
  %s9 = scalar_select 0, %s8, %s6
  $region1: #{tpu_custom_call.1} parent=0
    #allocation3 [shape = 'u8[4096]{0}', space=vmem, size = 0x1000, scoped, tag = 'input window, operand 0, single buffered']
    #allocation4 [shape = 's32[1]{0}', space=sflag, size = 0x4, scoped, tag = 'scoped memory for tpu_custom_call.1']
    #allocation5 [shape = 's32[1]{0}', space=sflag, size = 0x4, scoped, tag = 'scoped memory for tpu_custom_call.1']
    #allocation6 [shape = 'u8[524288]{0}', space=vmem, size = 0x80000, scoped, tag = 'input window, operand 1, single buffered']
    #allocation7 [shape = 's32[1]{0}', space=sflag, size = 0x4, scoped, tag = 'scoped memory for tpu_custom_call.1']
    #allocation8 [shape = 'u8[65536]{0}', space=vmem, size = 0x10000, scoped, tag = 'input window, operand 2, single buffered']
    #allocation9 [shape = 'u8[4096]{0}', space=vmem, size = 0x1000, scoped, tag = 'output window, operand 0, single buffered']
    %10 = vsyncpa [#allocation4], 0
    %11 = vsyncpa [#allocation7], 0
    %12 = vsyncpa [#allocation5], 0
    // Predicated region
    $region2: #{tpu_custom_call.1} parent=1 // pred_check
      _
    $region3: #{tpu_custom_call.1} parent=1 // pred_check_branch
      %14 = sbr.rel (0) target = $region5
    $region4: #{tpu_custom_call.1} parent=1 // pred_region
      %s16 = ssub.s32 128, 128
      %17 = vsyncadd [#allocation4], %s16
      %s19 = sshll.u32 [#allocation3], 4
      %s20 = int_to_ptr.vmem [resolvable:$true] %s19
      %22 = dma.hbm_to_vmem [thread:$0]  %s0, 128, %s20, [#allocation4]
    $region5: #{tpu_custom_call.1} parent=1 // pred_fallthru
      _
    // Predicated region
    $region6: #{tpu_custom_call.1} parent=1 // pred_check
      _
    $region7: #{tpu_custom_call.1} parent=1 // pred_check_branch
      %24 = sbr.rel (0) target = $region9
    $region8: #{tpu_custom_call.1} parent=1 // pred_region
      %s26 = ssub.s32 16384, 16384
      %27 = vsyncadd [#allocation7], %s26
      %s28 = sshll.u32 [#allocation6], 4
      %s29 = int_to_ptr.vmem [resolvable:$true] %s28
      %34 = dma.hbm_to_vmem [thread:$0]  %s1, 16384, %s29, [#allocation7], 128, 128, 8
    $region9: #{tpu_custom_call.1} parent=1 // pred_fallthru
      _
    // Predicated region
    $region10: #{tpu_custom_call.1} parent=1 // pred_check
      _
    $region11: #{tpu_custom_call.1} parent=1 // pred_check_branch
      %36 = sbr.rel (0) target = $region13
    $region12: #{tpu_custom_call.1} parent=1 // pred_region
      %s38 = ssub.s32 2048, 2048
      %39 = vsyncadd [#allocation7], %s38
      %s40 = sshll.u32 [#allocation8], 4
      %s41 = int_to_ptr.vmem [resolvable:$true] %s40
      %46 = dma.hbm_to_vmem [thread:$0]  %s2, 2048, %s41, [#allocation7], 128, 128, 8
    $region13: #{tpu_custom_call.1} parent=1 // pred_fallthru
      _
    // Predicated region
    $region14: #{tpu_custom_call.1} parent=1 // pred_check
      _
    $region15: #{tpu_custom_call.1} parent=1 // pred_check_branch
      %48 = sbr.rel (0) target = $region17
    $region16: #{tpu_custom_call.1} parent=1 // pred_region
      _
    $region17: #{tpu_custom_call.1} parent=1 // pred_fallthru
      _
    // Predicated region
    $region18: #{tpu_custom_call.1} parent=1 // pred_check
      _
    $region19: #{tpu_custom_call.1} parent=1 // pred_check_branch
      %50 = sbr.rel (0) target = $region21
    $region20: #{tpu_custom_call.1} parent=1 // pred_region
      _
    $region21: #{tpu_custom_call.1} parent=1 // pred_fallthru
      _
    // Predicated region
    $region22: #{tpu_custom_call.1} parent=1 // pred_check
      _
    $region23: #{tpu_custom_call.1} parent=1 // pred_check_branch
      %52 = sbr.rel (0) target = $region25
    $region24: #{tpu_custom_call.1} parent=1 // pred_region
      %53 = dma.done [#allocation4], 128
    $region25: #{tpu_custom_call.1} parent=1 // pred_fallthru
      _
    // Predicated region
    $region26: #{tpu_custom_call.1} parent=1 // pred_check
      _
    $region27: #{tpu_custom_call.1} parent=1 // pred_check_branch
      %55 = sbr.rel (0) target = $region29
    $region28: #{tpu_custom_call.1} parent=1 // pred_region
      %56 = dma.done [#allocation7], 16384
    $region29: #{tpu_custom_call.1} parent=1 // pred_fallthru
      _
    // Predicated region
    $region30: #{tpu_custom_call.1} parent=1 // pred_check
      _
    $region31: #{tpu_custom_call.1} parent=1 // pred_check_branch
      %58 = sbr.rel (0) target = $region33
    $region32: #{tpu_custom_call.1} parent=1 // pred_region
      %59 = dma.done [#allocation7], 2048
    $region33: #{tpu_custom_call.1} parent=1 // pred_fallthru
      _
    %v60 = vld [vmem:[#allocation3] sm:$0xff]
    %v61 = vlaneseq
    %v62 = vand.u32 %v61, 127
    %63 = vset.pattern.permute.xlu0 2
    %64 = vperm.xlu0 %63, %v60
    %v65 = vpop.permute.xlu0 %64
    %vm66 = vcmp.eq.s32.totalorder %v62, %v65
    %67 = vset.pattern.permute.xlu0 1
    %68 = vperm.xlu0 %67, %v60
    %v69 = vpop.permute.xlu0 %68
    %vm70 = vcmp.eq.s32.totalorder %v62, %v69
    %vm71 = vmor %vm66, %vm70
    %72 = vset.pattern.permute.xlu0 3
    %73 = vperm.xlu0 %72, %v60
    %v74 = vpop.permute.xlu0 %73
    %vm75 = vcmp.eq.s32.totalorder %v62, %v74
    %vm76 = vmor %vm71, %vm75
    %v77 = vsel %vm76, 1, 0
    %v78 = vcvt.s32.f32 %v77
    %79 = vst [vmem:[#allocation2] sm:$0xff] %v78
    %80 = vset.pattern.permute.xlu0 0
    %81 = vperm.xlu0 %80, %v60
    %v82 = vpop.permute.xlu0 %81
    %vm83 = vcmp.eq.s32.totalorder %v62, %v82
    %v84 = vsel %vm83, 1, 0
    %v85 = vcvt.s32.f32 %v84
    %86 = vst [vmem:[#allocation2 + $0x8] sm:$0xff] %v85
    %87 = vset.pattern.permute.xlu0 6
    %88 = vperm.xlu0 %87, %v60
    %v89 = vpop.permute.xlu0 %88
    %vm90 = vcmp.eq.s32.totalorder %v62, %v89
    %91 = vset.pattern.permute.xlu0 5
    %92 = vperm.xlu0 %91, %v60
    %v93 = vpop.permute.xlu0 %92
    %vm94 = vcmp.eq.s32.totalorder %v62, %v93
    %vm95 = vmor %vm90, %vm94
    %96 = vset.pattern.permute.xlu0 7
    %97 = vperm.xlu0 %96, %v60
    %v98 = vpop.permute.xlu0 %97
    %vm99 = vcmp.eq.s32.totalorder %v62, %v98
    %vm100 = vmor %vm95, %vm99
    %v101 = vsel %vm100, 1, 0
    %v102 = vcvt.s32.f32 %v101
    %103 = vst [vmem:[#allocation2 + $0x10] sm:$0xff] %v102
    %104 = vset.pattern.permute.xlu0 4
    %105 = vperm.xlu0 %104, %v60
    %v106 = vpop.permute.xlu0 %105
    %vm107 = vcmp.eq.s32.totalorder %v62, %v106
    %v108 = vsel %vm107, 1, 0
    %v109 = vcvt.s32.f32 %v108
    %110 = vst [vmem:[#allocation2 + $0x18] sm:$0xff] %v109
    %111 = vset.pattern.permute.xlu0 10
    %112 = vperm.xlu0 %111, %v60
    %v113 = vpop.permute.xlu0 %112
    %vm114 = vcmp.eq.s32.totalorder %v62, %v113
    %115 = vset.pattern.permute.xlu0 9
    %116 = vperm.xlu0 %115, %v60
    %v117 = vpop.permute.xlu0 %116
    %vm118 = vcmp.eq.s32.totalorder %v62, %v117
    %vm119 = vmor %vm114, %vm118
    %120 = vset.pattern.permute.xlu0 11
    %121 = vperm.xlu0 %120, %v60
    %v122 = vpop.permute.xlu0 %121
    %vm123 = vcmp.eq.s32.totalorder %v62, %v122
    %vm124 = vmor %vm119, %vm123
    %v125 = vsel %vm124, 1, 0
    %v126 = vcvt.s32.f32 %v125
    %127 = vst [vmem:[#allocation2 + $0x20] sm:$0xff] %v126
    %128 = vset.pattern.permute.xlu0 8
    %129 = vperm.xlu0 %128, %v60
    %v130 = vpop.permute.xlu0 %129
    %vm131 = vcmp.eq.s32.totalorder %v62, %v130
    %v132 = vsel %vm131, 1, 0
    %v133 = vcvt.s32.f32 %v132
    %134 = vst [vmem:[#allocation2 + $0x28] sm:$0xff] %v133
    %135 = vset.pattern.permute.xlu0 14
    %136 = vperm.xlu0 %135, %v60
    %v137 = vpop.permute.xlu0 %136
    %vm138 = vcmp.eq.s32.totalorder %v62, %v137
    %139 = vset.pattern.permute.xlu0 13
    %140 = vperm.xlu0 %139, %v60
    %v141 = vpop.permute.xlu0 %140
    %vm142 = vcmp.eq.s32.totalorder %v62, %v141
    %vm143 = vmor %vm138, %vm142
    %144 = vset.pattern.permute.xlu0 15
    %145 = vperm.xlu0 %144, %v60
    %v146 = vpop.permute.xlu0 %145
    %vm147 = vcmp.eq.s32.totalorder %v62, %v146
    %vm148 = vmor %vm143, %vm147
    %v149 = vsel %vm148, 1, 0
    %v150 = vcvt.s32.f32 %v149
    %151 = vst [vmem:[#allocation2 + $0x30] sm:$0xff] %v150
    %152 = vset.pattern.permute.xlu0 12
    %153 = vperm.xlu0 %152, %v60
    %v154 = vpop.permute.xlu0 %153
    %vm155 = vcmp.eq.s32.totalorder %v62, %v154
    %v156 = vsel %vm155, 1, 0
    %v157 = vcvt.s32.f32 %v156
    %158 = vst [vmem:[#allocation2 + $0x38] sm:$0xff] %v157
    %v159 = vld [vmem:[#allocation2] sm:$0xff]
    %v160 = vld [vmem:[#allocation2 + $0x8] sm:$0xff]
    %v161 = vld [vmem:[#allocation2 + $0x10] sm:$0xff]
    %v162 = vld [vmem:[#allocation2 + $0x18] sm:$0xff]
    %v163 = vld [vmem:[#allocation2 + $0x20] sm:$0xff]
    %v164 = vld [vmem:[#allocation2 + $0x28] sm:$0xff]
    %v165 = vld [vmem:[#allocation2 + $0x30] sm:$0xff]
    %v166 = vld [vmem:[#allocation2 + $0x38] sm:$0xff]
    %v167 = vld [vmem:[#allocation6] sm:$0xff]
    %v168 = vld [vmem:[#allocation6 + $0x8] sm:$0xff]
    %v169 = vld [vmem:[#allocation6 + $0x10] sm:$0xff]
    %v170 = vld [vmem:[#allocation6 + $0x18] sm:$0xff]
    %v171 = vld [vmem:[#allocation6 + $0x20] sm:$0xff]
    %v172 = vld [vmem:[#allocation6 + $0x28] sm:$0xff]
    %v173 = vld [vmem:[#allocation6 + $0x30] sm:$0xff]
    %v174 = vld [vmem:[#allocation6 + $0x38] sm:$0xff]
    %v175 = vld [vmem:[#allocation6 + $0x40] sm:$0xff]
    %v176 = vld [vmem:[#allocation6 + $0x48] sm:$0xff]
    %v177 = vld [vmem:[#allocation6 + $0x50] sm:$0xff]
    %v178 = vld [vmem:[#allocation6 + $0x58] sm:$0xff]
    %v179 = vld [vmem:[#allocation6 + $0x60] sm:$0xff]
    %v180 = vld [vmem:[#allocation6 + $0x68] sm:$0xff]
    %v181 = vld [vmem:[#allocation6 + $0x70] sm:$0xff]
    %v182 = vld [vmem:[#allocation6 + $0x78] sm:$0xff]
    %v183 = vld [vmem:[#allocation6 + $0x80] sm:$0xff]
    %v184 = vld [vmem:[#allocation6 + $0x88] sm:$0xff]
    %v185 = vld [vmem:[#allocation6 + $0x90] sm:$0xff]
    %v186 = vld [vmem:[#allocation6 + $0x98] sm:$0xff]
    %v187 = vld [vmem:[#allocation6 + $0xa0] sm:$0xff]
    %v188 = vld [vmem:[#allocation6 + $0xa8] sm:$0xff]
    %v189 = vld [vmem:[#allocation6 + $0xb0] sm:$0xff]
    %v190 = vld [vmem:[#allocation6 + $0xb8] sm:$0xff]
    %v191 = vld [vmem:[#allocation6 + $0xc0] sm:$0xff]
    %v192 = vld [vmem:[#allocation6 + $0xc8] sm:$0xff]
    %v193 = vld [vmem:[#allocation6 + $0xd0] sm:$0xff]
    %v194 = vld [vmem:[#allocation6 + $0xd8] sm:$0xff]
    %v195 = vld [vmem:[#allocation6 + $0xe0] sm:$0xff]
    %v196 = vld [vmem:[#allocation6 + $0xe8] sm:$0xff]
    %v197 = vld [vmem:[#allocation6 + $0xf0] sm:$0xff]
    %v198 = vld [vmem:[#allocation6 + $0xf8] sm:$0xff]
    %v199 = vld [vmem:[#allocation6 + $0x100] sm:$0xff]
    %v200 = vld [vmem:[#allocation6 + $0x108] sm:$0xff]
    %v201 = vld [vmem:[#allocation6 + $0x110] sm:$0xff]
    %v202 = vld [vmem:[#allocation6 + $0x118] sm:$0xff]
    %v203 = vld [vmem:[#allocation6 + $0x120] sm:$0xff]
    %v204 = vld [vmem:[#allocation6 + $0x128] sm:$0xff]
    %v205 = vld [vmem:[#allocation6 + $0x130] sm:$0xff]
    %v206 = vld [vmem:[#allocation6 + $0x138] sm:$0xff]
    %v207 = vld [vmem:[#allocation6 + $0x140] sm:$0xff]
    %v208 = vld [vmem:[#allocation6 + $0x148] sm:$0xff]
    %v209 = vld [vmem:[#allocation6 + $0x150] sm:$0xff]
    %v210 = vld [vmem:[#allocation6 + $0x158] sm:$0xff]
    %v211 = vld [vmem:[#allocation6 + $0x160] sm:$0xff]
    %v212 = vld [vmem:[#allocation6 + $0x168] sm:$0xff]
    %v213 = vld [vmem:[#allocation6 + $0x170] sm:$0xff]
    %v214 = vld [vmem:[#allocation6 + $0x178] sm:$0xff]
    %v215 = vld [vmem:[#allocation6 + $0x180] sm:$0xff]
    %v216 = vld [vmem:[#allocation6 + $0x188] sm:$0xff]
    %v217 = vld [vmem:[#allocation6 + $0x190] sm:$0xff]
    %v218 = vld [vmem:[#allocation6 + $0x198] sm:$0xff]
    %v219 = vld [vmem:[#allocation6 + $0x1a0] sm:$0xff]
    %v220 = vld [vmem:[#allocation6 + $0x1a8] sm:$0xff]
    %v221 = vld [vmem:[#allocation6 + $0x1b0] sm:$0xff]
    %v222 = vld [vmem:[#allocation6 + $0x1b8] sm:$0xff]
    %v223 = vld [vmem:[#allocation6 + $0x1c0] sm:$0xff]
    %v224 = vld [vmem:[#allocation6 + $0x1c8] sm:$0xff]
    %v225 = vld [vmem:[#allocation6 + $0x1d0] sm:$0xff]
    %v226 = vld [vmem:[#allocation6 + $0x1d8] sm:$0xff]
    %v227 = vld [vmem:[#allocation6 + $0x1e0] sm:$0xff]
    %v228 = vld [vmem:[#allocation6 + $0x1e8] sm:$0xff]
    %v229 = vld [vmem:[#allocation6 + $0x1f0] sm:$0xff]
    %v230 = vld [vmem:[#allocation6 + $0x1f8] sm:$0xff]
    %v231 = vld [vmem:[#allocation6 + $0x200] sm:$0xff]
    %v232 = vld [vmem:[#allocation6 + $0x208] sm:$0xff]
    %v233 = vld [vmem:[#allocation6 + $0x210] sm:$0xff]
    %v234 = vld [vmem:[#allocation6 + $0x218] sm:$0xff]
    %v235 = vld [vmem:[#allocation6 + $0x220] sm:$0xff]
    %v236 = vld [vmem:[#allocation6 + $0x228] sm:$0xff]
    %v237 = vld [vmem:[#allocation6 + $0x230] sm:$0xff]
    %v238 = vld [vmem:[#allocation6 + $0x238] sm:$0xff]
    %v239 = vld [vmem:[#allocation6 + $0x240] sm:$0xff]
    %v240 = vld [vmem:[#allocation6 + $0x248] sm:$0xff]
    %v241 = vld [vmem:[#allocation6 + $0x250] sm:$0xff]
    %v242 = vld [vmem:[#allocation6 + $0x258] sm:$0xff]
    %v243 = vld [vmem:[#allocation6 + $0x260] sm:$0xff]
    %v244 = vld [vmem:[#allocation6 + $0x268] sm:$0xff]
    %v245 = vld [vmem:[#allocation6 + $0x270] sm:$0xff]
    %v246 = vld [vmem:[#allocation6 + $0x278] sm:$0xff]
    %v247 = vld [vmem:[#allocation6 + $0x280] sm:$0xff]
    %v248 = vld [vmem:[#allocation6 + $0x288] sm:$0xff]
    %v249 = vld [vmem:[#allocation6 + $0x290] sm:$0xff]
    %v250 = vld [vmem:[#allocation6 + $0x298] sm:$0xff]
    %v251 = vld [vmem:[#allocation6 + $0x2a0] sm:$0xff]
    %v252 = vld [vmem:[#allocation6 + $0x2a8] sm:$0xff]
    %v253 = vld [vmem:[#allocation6 + $0x2b0] sm:$0xff]
    %v254 = vld [vmem:[#allocation6 + $0x2b8] sm:$0xff]
    %v255 = vld [vmem:[#allocation6 + $0x2c0] sm:$0xff]
    %v256 = vld [vmem:[#allocation6 + $0x2c8] sm:$0xff]
    %v257 = vld [vmem:[#allocation6 + $0x2d0] sm:$0xff]
    %v258 = vld [vmem:[#allocation6 + $0x2d8] sm:$0xff]
    %v259 = vld [vmem:[#allocation6 + $0x2e0] sm:$0xff]
    %v260 = vld [vmem:[#allocation6 + $0x2e8] sm:$0xff]
    %v261 = vld [vmem:[#allocation6 + $0x2f0] sm:$0xff]
    %v262 = vld [vmem:[#allocation6 + $0x2f8] sm:$0xff]
    %v263 = vld [vmem:[#allocation6 + $0x300] sm:$0xff]
    %v264 = vld [vmem:[#allocation6 + $0x308] sm:$0xff]
    %v265 = vld [vmem:[#allocation6 + $0x310] sm:$0xff]
    %v266 = vld [vmem:[#allocation6 + $0x318] sm:$0xff]
    %v267 = vld [vmem:[#allocation6 + $0x320] sm:$0xff]
    %v268 = vld [vmem:[#allocation6 + $0x328] sm:$0xff]
    %v269 = vld [vmem:[#allocation6 + $0x330] sm:$0xff]
    %v270 = vld [vmem:[#allocation6 + $0x338] sm:$0xff]
    %v271 = vld [vmem:[#allocation6 + $0x340] sm:$0xff]
    %v272 = vld [vmem:[#allocation6 + $0x348] sm:$0xff]
    %v273 = vld [vmem:[#allocation6 + $0x350] sm:$0xff]
    %v274 = vld [vmem:[#allocation6 + $0x358] sm:$0xff]
    %v275 = vld [vmem:[#allocation6 + $0x360] sm:$0xff]
    %v276 = vld [vmem:[#allocation6 + $0x368] sm:$0xff]
    %v277 = vld [vmem:[#allocation6 + $0x370] sm:$0xff]
    %v278 = vld [vmem:[#allocation6 + $0x378] sm:$0xff]
    %v279 = vld [vmem:[#allocation6 + $0x380] sm:$0xff]
    %v280 = vld [vmem:[#allocation6 + $0x388] sm:$0xff]
    %v281 = vld [vmem:[#allocation6 + $0x390] sm:$0xff]
    %v282 = vld [vmem:[#allocation6 + $0x398] sm:$0xff]
    %v283 = vld [vmem:[#allocation6 + $0x3a0] sm:$0xff]
    %v284 = vld [vmem:[#allocation6 + $0x3a8] sm:$0xff]
    %v285 = vld [vmem:[#allocation6 + $0x3b0] sm:$0xff]
    %v286 = vld [vmem:[#allocation6 + $0x3b8] sm:$0xff]
    %v287 = vld [vmem:[#allocation6 + $0x3c0] sm:$0xff]
    %v288 = vld [vmem:[#allocation6 + $0x3c8] sm:$0xff]
    %v289 = vld [vmem:[#allocation6 + $0x3d0] sm:$0xff]
    %v290 = vld [vmem:[#allocation6 + $0x3d8] sm:$0xff]
    %v291 = vld [vmem:[#allocation6 + $0x3e0] sm:$0xff]
    %v292 = vld [vmem:[#allocation6 + $0x3e8] sm:$0xff]
    %v293 = vld [vmem:[#allocation6 + $0x3f0] sm:$0xff]
    %v294 = vld [vmem:[#allocation6 + $0x3f8] sm:$0xff]
    %295 = vmatprep.subr.mxu0 0.0
    %296 = vmatpush1.msra.mxu0 %v182
    %297 = vmatprep.subr.mxu0 0.0
    %298 = vmatpush1.msra.mxu0 %v181
    %299 = vmatprep.subr.mxu0 0.0
    %300 = vmatpush1.msra.mxu0 %v180
    %301 = vmatprep.subr.mxu0 0.0
    %302 = vmatpush1.msra.mxu0 %v179
    %303 = vmatprep.subr.mxu0 0.0
    %304 = vmatpush1.msra.mxu0 %v178
    %305 = vmatprep.subr.mxu0 0.0
    %306 = vmatpush1.msra.mxu0 %v177
    %307 = vmatprep.subr.mxu0 0.0
    %308 = vmatpush1.msra.mxu0 %v176
    %309 = vmatprep.subr.mxu0 0.0
    %310 = vmatpush1.msra.mxu0 %v175
    %311 = vmatprep.subr.mxu0 0.0
    %312 = vmatpush1.msra.mxu0 %v174
    %313 = vmatprep.subr.mxu0 0.0
    %314 = vmatpush1.msra.mxu0 %v173
    %315 = vmatprep.subr.mxu0 0.0
    %316 = vmatpush1.msra.mxu0 %v172
    %317 = vmatprep.subr.mxu0 0.0
    %318 = vmatpush1.msra.mxu0 %v171
    %319 = vmatprep.subr.mxu0 0.0
    %320 = vmatpush1.msra.mxu0 %v170
    %321 = vmatprep.subr.mxu0 0.0
    %322 = vmatpush1.msra.mxu0 %v169
    %323 = vmatprep.subr.mxu0 0.0
    %324 = vmatpush1.msra.mxu0 %v168
    %325 = vmatprep.subr.mxu0 0.0
    %326 = vmatpush1.msra.mxu0 %v167
    %327 = vmatprep.subr.mxu0 0.0
    %328 = vmatpush2.msra.mxu0 %v198
    %329 = vmatprep.subr.mxu0 0.0
    %330 = vmatpush2.msra.mxu0 %v197
    %331 = vmatprep.subr.mxu0 0.0
    %332 = vmatpush2.msra.mxu0 %v196
    %333 = vmatprep.subr.mxu0 0.0
    %334 = vmatpush2.msra.mxu0 %v195
    %335 = vmatprep.subr.mxu0 0.0
    %336 = vmatpush2.msra.mxu0 %v194
    %337 = vmatprep.subr.mxu0 0.0
    %338 = vmatpush2.msra.mxu0 %v193
    %339 = vmatprep.subr.mxu0 0.0
    %340 = vmatpush2.msra.mxu0 %v192
    %341 = vmatprep.subr.mxu0 0.0
    %342 = vmatpush2.msra.mxu0 %v191
    %343 = vmatprep.subr.mxu0 0.0
    %344 = vmatpush2.msra.mxu0 %v190
    %345 = vmatprep.subr.mxu0 0.0
    %346 = vmatpush2.msra.mxu0 %v189
    %347 = vmatprep.subr.mxu0 0.0
    %348 = vmatpush2.msra.mxu0 %v188
    %349 = vmatprep.subr.mxu0 0.0
    %350 = vmatpush2.msra.mxu0 %v187
    %351 = vmatprep.subr.mxu0 0.0
    %352 = vmatpush2.msra.mxu0 %v186
    %353 = vmatprep.subr.mxu0 0.0
    %354 = vmatpush2.msra.mxu0 %v185
    %355 = vmatprep.subr.mxu0 0.0
    %356 = vmatpush2.msra.mxu0 %v184
    %357 = vmatprep.subr.mxu0 0.0
    %358 = vmatpush2.msra.mxu0 %v183
    %359 = vmatprep.mubr.f32.mxu0 %v160
    %360 = vmatmul.mubr.f32.gmra.mxu0 %v159
    %v361 = vpop.f32.mrf.mxu0
    %v362 = vadd.f32 0.0, %v361
    %v363 = vpop.f32.mrf.mxu0
    %364 = vdwg.mxu0
    %365 = vmatprep.subr.mxu0 0.0
    %366 = vmatpush1.msra.mxu0 %v214
    %367 = vmatprep.subr.mxu0 0.0
    %368 = vmatpush1.msra.mxu0 %v213
    %369 = vmatprep.subr.mxu0 0.0
    %370 = vmatpush1.msra.mxu0 %v212
    %371 = vmatprep.subr.mxu0 0.0
    %372 = vmatpush1.msra.mxu0 %v211
    %373 = vmatprep.subr.mxu0 0.0
    %374 = vmatpush1.msra.mxu0 %v210
    %375 = vmatprep.subr.mxu0 0.0
    %376 = vmatpush1.msra.mxu0 %v209
    %377 = vmatprep.subr.mxu0 0.0
    %378 = vmatpush1.msra.mxu0 %v208
    %379 = vmatprep.subr.mxu0 0.0
    %380 = vmatpush1.msra.mxu0 %v207
    %381 = vmatprep.subr.mxu0 0.0
    %382 = vmatpush1.msra.mxu0 %v206
    %383 = vmatprep.subr.mxu0 0.0
    %384 = vmatpush1.msra.mxu0 %v205
    %385 = vmatprep.subr.mxu0 0.0
    %386 = vmatpush1.msra.mxu0 %v204
    %387 = vmatprep.subr.mxu0 0.0
    %388 = vmatpush1.msra.mxu0 %v203
    %389 = vmatprep.subr.mxu0 0.0
    %390 = vmatpush1.msra.mxu0 %v202
    %391 = vmatprep.subr.mxu0 0.0
    %392 = vmatpush1.msra.mxu0 %v201
    %393 = vmatprep.subr.mxu0 0.0
    %394 = vmatpush1.msra.mxu0 %v200
    %395 = vmatprep.subr.mxu0 0.0
    %396 = vmatpush1.msra.mxu0 %v199
    %397 = vmatprep.subr.mxu0 0.0
    %398 = vmatpush2.msra.mxu0 %v230
    %399 = vmatprep.subr.mxu0 0.0
    %400 = vmatpush2.msra.mxu0 %v229
    %401 = vmatprep.subr.mxu0 0.0
    %402 = vmatpush2.msra.mxu0 %v228
    %403 = vmatprep.subr.mxu0 0.0
    %404 = vmatpush2.msra.mxu0 %v227
    %405 = vmatprep.subr.mxu0 0.0
    %406 = vmatpush2.msra.mxu0 %v226
    %407 = vmatprep.subr.mxu0 0.0
    %408 = vmatpush2.msra.mxu0 %v225
    %409 = vmatprep.subr.mxu0 0.0
    %410 = vmatpush2.msra.mxu0 %v224
    %411 = vmatprep.subr.mxu0 0.0
    %412 = vmatpush2.msra.mxu0 %v223
    %413 = vmatprep.subr.mxu0 0.0
    %414 = vmatpush2.msra.mxu0 %v222
    %415 = vmatprep.subr.mxu0 0.0
    %416 = vmatpush2.msra.mxu0 %v221
    %417 = vmatprep.subr.mxu0 0.0
    %418 = vmatpush2.msra.mxu0 %v220
    %419 = vmatprep.subr.mxu0 0.0
    %420 = vmatpush2.msra.mxu0 %v219
    %421 = vmatprep.subr.mxu0 0.0
    %422 = vmatpush2.msra.mxu0 %v218
    %423 = vmatprep.subr.mxu0 0.0
    %424 = vmatpush2.msra.mxu0 %v217
    %425 = vmatprep.subr.mxu0 0.0
    %426 = vmatpush2.msra.mxu0 %v216
    %427 = vmatprep.subr.mxu0 0.0
    %428 = vmatpush2.msra.mxu0 %v215
    %429 = vmatprep.mubr.f32.mxu0 %v162
    %430 = vmatmul.mubr.f32.gmra.mxu0 %v161
    %v431 = vpop.f32.mrf.mxu0
    %v432 = vadd.f32 %v362, %v431
    %v433 = vpop.f32.mrf.mxu0
    %434 = vdwg.mxu0
    %435 = vmatprep.subr.mxu0 0.0
    %436 = vmatpush1.msra.mxu0 %v246
    %437 = vmatprep.subr.mxu0 0.0
    %438 = vmatpush1.msra.mxu0 %v245
    %439 = vmatprep.subr.mxu0 0.0
    %440 = vmatpush1.msra.mxu0 %v244
    %441 = vmatprep.subr.mxu0 0.0
    %442 = vmatpush1.msra.mxu0 %v243
    %443 = vmatprep.subr.mxu0 0.0
    %444 = vmatpush1.msra.mxu0 %v242
    %445 = vmatprep.subr.mxu0 0.0
    %446 = vmatpush1.msra.mxu0 %v241
    %447 = vmatprep.subr.mxu0 0.0
    %448 = vmatpush1.msra.mxu0 %v240
    %449 = vmatprep.subr.mxu0 0.0
    %450 = vmatpush1.msra.mxu0 %v239
    %451 = vmatprep.subr.mxu0 0.0
    %452 = vmatpush1.msra.mxu0 %v238
    %453 = vmatprep.subr.mxu0 0.0
    %454 = vmatpush1.msra.mxu0 %v237
    %455 = vmatprep.subr.mxu0 0.0
    %456 = vmatpush1.msra.mxu0 %v236
    %457 = vmatprep.subr.mxu0 0.0
    %458 = vmatpush1.msra.mxu0 %v235
    %459 = vmatprep.subr.mxu0 0.0
    %460 = vmatpush1.msra.mxu0 %v234
    %461 = vmatprep.subr.mxu0 0.0
    %462 = vmatpush1.msra.mxu0 %v233
    %463 = vmatprep.subr.mxu0 0.0
    %464 = vmatpush1.msra.mxu0 %v232
    %465 = vmatprep.subr.mxu0 0.0
    %466 = vmatpush1.msra.mxu0 %v231
    %467 = vmatprep.subr.mxu0 0.0
    %468 = vmatpush2.msra.mxu0 %v262
    %469 = vmatprep.subr.mxu0 0.0
    %470 = vmatpush2.msra.mxu0 %v261
    %471 = vmatprep.subr.mxu0 0.0
    %472 = vmatpush2.msra.mxu0 %v260
    %473 = vmatprep.subr.mxu0 0.0
    %474 = vmatpush2.msra.mxu0 %v259
    %475 = vmatprep.subr.mxu0 0.0
    %476 = vmatpush2.msra.mxu0 %v258
    %477 = vmatprep.subr.mxu0 0.0
    %478 = vmatpush2.msra.mxu0 %v257
    %479 = vmatprep.subr.mxu0 0.0
    %480 = vmatpush2.msra.mxu0 %v256
    %481 = vmatprep.subr.mxu0 0.0
    %482 = vmatpush2.msra.mxu0 %v255
    %483 = vmatprep.subr.mxu0 0.0
    %484 = vmatpush2.msra.mxu0 %v254
    %485 = vmatprep.subr.mxu0 0.0
    %486 = vmatpush2.msra.mxu0 %v253
    %487 = vmatprep.subr.mxu0 0.0
    %488 = vmatpush2.msra.mxu0 %v252
    %489 = vmatprep.subr.mxu0 0.0
    %490 = vmatpush2.msra.mxu0 %v251
    %491 = vmatprep.subr.mxu0 0.0
    %492 = vmatpush2.msra.mxu0 %v250
    %493 = vmatprep.subr.mxu0 0.0
    %494 = vmatpush2.msra.mxu0 %v249
    %495 = vmatprep.subr.mxu0 0.0
    %496 = vmatpush2.msra.mxu0 %v248
    %497 = vmatprep.subr.mxu0 0.0
    %498 = vmatpush2.msra.mxu0 %v247
    %499 = vmatprep.mubr.f32.mxu0 %v164
    %500 = vmatmul.mubr.f32.gmra.mxu0 %v163
    %v501 = vpop.f32.mrf.mxu0
    %v502 = vadd.f32 %v432, %v501
    %v503 = vpop.f32.mrf.mxu0
    %504 = vdwg.mxu0
    %505 = vmatprep.subr.mxu0 0.0
    %506 = vmatpush1.msra.mxu0 %v278
    %507 = vmatprep.subr.mxu0 0.0
    %508 = vmatpush1.msra.mxu0 %v277
    %509 = vmatprep.subr.mxu0 0.0
    %510 = vmatpush1.msra.mxu0 %v276
    %511 = vmatprep.subr.mxu0 0.0
    %512 = vmatpush1.msra.mxu0 %v275
    %513 = vmatprep.subr.mxu0 0.0
    %514 = vmatpush1.msra.mxu0 %v274
    %515 = vmatprep.subr.mxu0 0.0
    %516 = vmatpush1.msra.mxu0 %v273
    %517 = vmatprep.subr.mxu0 0.0
    %518 = vmatpush1.msra.mxu0 %v272
    %519 = vmatprep.subr.mxu0 0.0
    %520 = vmatpush1.msra.mxu0 %v271
    %521 = vmatprep.subr.mxu0 0.0
    %522 = vmatpush1.msra.mxu0 %v270
    %523 = vmatprep.subr.mxu0 0.0
    %524 = vmatpush1.msra.mxu0 %v269
    %525 = vmatprep.subr.mxu0 0.0
    %526 = vmatpush1.msra.mxu0 %v268
    %527 = vmatprep.subr.mxu0 0.0
    %528 = vmatpush1.msra.mxu0 %v267
    %529 = vmatprep.subr.mxu0 0.0
    %530 = vmatpush1.msra.mxu0 %v266
    %531 = vmatprep.subr.mxu0 0.0
    %532 = vmatpush1.msra.mxu0 %v265
    %533 = vmatprep.subr.mxu0 0.0
    %534 = vmatpush1.msra.mxu0 %v264
    %535 = vmatprep.subr.mxu0 0.0
    %536 = vmatpush1.msra.mxu0 %v263
    %537 = vmatprep.subr.mxu0 0.0
    %538 = vmatpush2.msra.mxu0 %v294
    %539 = vmatprep.subr.mxu0 0.0
    %540 = vmatpush2.msra.mxu0 %v293
    %541 = vmatprep.subr.mxu0 0.0
    %542 = vmatpush2.msra.mxu0 %v292
    %543 = vmatprep.subr.mxu0 0.0
    %544 = vmatpush2.msra.mxu0 %v291
    %545 = vmatprep.subr.mxu0 0.0
    %546 = vmatpush2.msra.mxu0 %v290
    %547 = vmatprep.subr.mxu0 0.0
    %548 = vmatpush2.msra.mxu0 %v289
    %549 = vmatprep.subr.mxu0 0.0
    %550 = vmatpush2.msra.mxu0 %v288
    %551 = vmatprep.subr.mxu0 0.0
    %552 = vmatpush2.msra.mxu0 %v287
    %553 = vmatprep.subr.mxu0 0.0
    %554 = vmatpush2.msra.mxu0 %v286
    %555 = vmatprep.subr.mxu0 0.0
    %556 = vmatpush2.msra.mxu0 %v285
    %557 = vmatprep.subr.mxu0 0.0
    %558 = vmatpush2.msra.mxu0 %v284
    %559 = vmatprep.subr.mxu0 0.0
    %560 = vmatpush2.msra.mxu0 %v283
    %561 = vmatprep.subr.mxu0 0.0
    %562 = vmatpush2.msra.mxu0 %v282
    %563 = vmatprep.subr.mxu0 0.0
    %564 = vmatpush2.msra.mxu0 %v281
    %565 = vmatprep.subr.mxu0 0.0
    %566 = vmatpush2.msra.mxu0 %v280
    %567 = vmatprep.subr.mxu0 0.0
    %568 = vmatpush2.msra.mxu0 %v279
    %569 = vmatprep.mubr.f32.mxu0 %v166
    %570 = vmatmul.mubr.f32.gmra.mxu0 %v165
    %v571 = vpop.f32.mrf.mxu0
    %v572 = vadd.f32 %v502, %v571
    %v573 = vpop.f32.mrf.mxu0
    %574 = vdwg.mxu0
    %v575 = vld [vmem:[#allocation8] sm:$0xff]
    %v576 = vld [vmem:[#allocation8 + $0x8] sm:$0xff]
    %v577 = vld [vmem:[#allocation8 + $0x10] sm:$0xff]
    %v578 = vld [vmem:[#allocation8 + $0x18] sm:$0xff]
    %v579 = vld [vmem:[#allocation8 + $0x20] sm:$0xff]
    %v580 = vld [vmem:[#allocation8 + $0x28] sm:$0xff]
    %v581 = vld [vmem:[#allocation8 + $0x30] sm:$0xff]
    %v582 = vld [vmem:[#allocation8 + $0x38] sm:$0xff]
    %v583 = vld [vmem:[#allocation8 + $0x40] sm:$0xff]
    %v584 = vld [vmem:[#allocation8 + $0x48] sm:$0xff]
    %v585 = vld [vmem:[#allocation8 + $0x50] sm:$0xff]
    %v586 = vld [vmem:[#allocation8 + $0x58] sm:$0xff]
    %v587 = vld [vmem:[#allocation8 + $0x60] sm:$0xff]
    %v588 = vld [vmem:[#allocation8 + $0x68] sm:$0xff]
    %v589 = vld [vmem:[#allocation8 + $0x70] sm:$0xff]
    %v590 = vld [vmem:[#allocation8 + $0x78] sm:$0xff]
    %591 = vmatprep.subr.mxu0 0.0
    %592 = vmatpush1.msra.mxu0 %v590
    %593 = vmatprep.subr.mxu0 0.0
    %594 = vmatpush1.msra.mxu0 %v589
    %595 = vmatprep.subr.mxu0 0.0
    %596 = vmatpush1.msra.mxu0 %v588
    %597 = vmatprep.subr.mxu0 0.0
    %598 = vmatpush1.msra.mxu0 %v587
    %599 = vmatprep.subr.mxu0 0.0
    %600 = vmatpush1.msra.mxu0 %v586
    %601 = vmatprep.subr.mxu0 0.0
    %602 = vmatpush1.msra.mxu0 %v585
    %603 = vmatprep.subr.mxu0 0.0
    %604 = vmatpush1.msra.mxu0 %v584
    %605 = vmatprep.subr.mxu0 0.0
    %606 = vmatpush1.msra.mxu0 %v583
    %607 = vmatprep.subr.mxu0 0.0
    %608 = vmatpush1.msra.mxu0 %v582
    %609 = vmatprep.subr.mxu0 0.0
    %610 = vmatpush1.msra.mxu0 %v581
    %611 = vmatprep.subr.mxu0 0.0
    %612 = vmatpush1.msra.mxu0 %v580
    %613 = vmatprep.subr.mxu0 0.0
    %614 = vmatpush1.msra.mxu0 %v579
    %615 = vmatprep.subr.mxu0 0.0
    %616 = vmatpush1.msra.mxu0 %v578
    %617 = vmatprep.subr.mxu0 0.0
    %618 = vmatpush1.msra.mxu0 %v577
    %619 = vmatprep.subr.mxu0 0.0
    %620 = vmatpush1.msra.mxu0 %v576
    %621 = vmatprep.subr.mxu0 0.0
    %622 = vmatpush1.msra.mxu0 %v575
    %623 = vmatprep.subr.mxu0 0.0
    %624 = vmatpush2.msra.mxu0 0.0
    %625 = vmatprep.subr.mxu0 0.0
    %626 = vmatpush2.msra.mxu0 0.0
    %627 = vmatprep.subr.mxu0 0.0
    %628 = vmatpush2.msra.mxu0 0.0
    %629 = vmatprep.subr.mxu0 0.0
    %630 = vmatpush2.msra.mxu0 0.0
    %631 = vmatprep.subr.mxu0 0.0
    %632 = vmatpush2.msra.mxu0 0.0
    %633 = vmatprep.subr.mxu0 0.0
    %634 = vmatpush2.msra.mxu0 0.0
    %635 = vmatprep.subr.mxu0 0.0
    %636 = vmatpush2.msra.mxu0 0.0
    %637 = vmatprep.subr.mxu0 0.0
    %638 = vmatpush2.msra.mxu0 0.0
    %639 = vmatprep.subr.mxu0 0.0
    %640 = vmatpush2.msra.mxu0 0.0
    %641 = vmatprep.subr.mxu0 0.0
    %642 = vmatpush2.msra.mxu0 0.0
    %643 = vmatprep.subr.mxu0 0.0
    %644 = vmatpush2.msra.mxu0 0.0
    %645 = vmatprep.subr.mxu0 0.0
    %646 = vmatpush2.msra.mxu0 0.0
    %647 = vmatprep.subr.mxu0 0.0
    %648 = vmatpush2.msra.mxu0 0.0
    %649 = vmatprep.subr.mxu0 0.0
    %650 = vmatpush2.msra.mxu0 0.0
    %651 = vmatprep.subr.mxu0 0.0
    %652 = vmatpush2.msra.mxu0 0.0
    %653 = vmatprep.subr.mxu0 0.0
    %654 = vmatpush2.msra.mxu0 0.0
    %655 = vmatprep.mubr.f32.mxu0 0.0
    %656 = vmatmul.mubr.f32.gmra.mxu0 %v572
    %v657 = vpop.f32.mrf.mxu0
    %v658 = vadd.f32 0.0, %v657
    %v659 = vpop.f32.mrf.mxu0
    %660 = vdwg.mxu0
    %v661 = vmul.f32 %v572, %v572
    %662 = vmatprep.subr.mxu0 0.0
    %663 = vmatpush1.msra.mxu0 %v590
    %664 = vmatprep.subr.mxu0 0.0
    %665 = vmatpush1.msra.mxu0 %v589
    %666 = vmatprep.subr.mxu0 0.0
    %667 = vmatpush1.msra.mxu0 %v588
    %668 = vmatprep.subr.mxu0 0.0
    %669 = vmatpush1.msra.mxu0 %v587
    %670 = vmatprep.subr.mxu0 0.0
    %671 = vmatpush1.msra.mxu0 %v586
    %672 = vmatprep.subr.mxu0 0.0
    %673 = vmatpush1.msra.mxu0 %v585
    %674 = vmatprep.subr.mxu0 0.0
    %675 = vmatpush1.msra.mxu0 %v584
    %676 = vmatprep.subr.mxu0 0.0
    %677 = vmatpush1.msra.mxu0 %v583
    %678 = vmatprep.subr.mxu0 0.0
    %679 = vmatpush1.msra.mxu0 %v582
    %680 = vmatprep.subr.mxu0 0.0
    %681 = vmatpush1.msra.mxu0 %v581
    %682 = vmatprep.subr.mxu0 0.0
    %683 = vmatpush1.msra.mxu0 %v580
    %684 = vmatprep.subr.mxu0 0.0
    %685 = vmatpush1.msra.mxu0 %v579
    %686 = vmatprep.subr.mxu0 0.0
    %687 = vmatpush1.msra.mxu0 %v578
    %688 = vmatprep.subr.mxu0 0.0
    %689 = vmatpush1.msra.mxu0 %v577
    %690 = vmatprep.subr.mxu0 0.0
    %691 = vmatpush1.msra.mxu0 %v576
    %692 = vmatprep.subr.mxu0 0.0
    %693 = vmatpush1.msra.mxu0 %v575
    %694 = vmatprep.subr.mxu0 0.0
    %695 = vmatpush2.msra.mxu0 0.0
    %696 = vmatprep.subr.mxu0 0.0
    %697 = vmatpush2.msra.mxu0 0.0
    %698 = vmatprep.subr.mxu0 0.0
    %699 = vmatpush2.msra.mxu0 0.0
    %700 = vmatprep.subr.mxu0 0.0
    %701 = vmatpush2.msra.mxu0 0.0
    %702 = vmatprep.subr.mxu0 0.0
    %703 = vmatpush2.msra.mxu0 0.0
    %704 = vmatprep.subr.mxu0 0.0
    %705 = vmatpush2.msra.mxu0 0.0
    %706 = vmatprep.subr.mxu0 0.0
    %707 = vmatpush2.msra.mxu0 0.0
    %708 = vmatprep.subr.mxu0 0.0
    %709 = vmatpush2.msra.mxu0 0.0
    %710 = vmatprep.subr.mxu0 0.0
    %711 = vmatpush2.msra.mxu0 0.0
    %712 = vmatprep.subr.mxu0 0.0
    %713 = vmatpush2.msra.mxu0 0.0
    %714 = vmatprep.subr.mxu0 0.0
    %715 = vmatpush2.msra.mxu0 0.0
    %716 = vmatprep.subr.mxu0 0.0
    %717 = vmatpush2.msra.mxu0 0.0
    %718 = vmatprep.subr.mxu0 0.0
    %719 = vmatpush2.msra.mxu0 0.0
    %720 = vmatprep.subr.mxu0 0.0
    %721 = vmatpush2.msra.mxu0 0.0
    %722 = vmatprep.subr.mxu0 0.0
    %723 = vmatpush2.msra.mxu0 0.0
    %724 = vmatprep.subr.mxu0 0.0
    %725 = vmatpush2.msra.mxu0 0.0
    %726 = vmatprep.mubr.f32.mxu0 0.0
    %727 = vmatmul.mubr.f32.gmra.mxu0 %v661
    %v728 = vpop.f32.mrf.mxu0
    %v729 = vadd.f32 0.0, %v728
    %v730 = vpop.f32.mrf.mxu0
    %731 = vdwg.mxu0
    %v732 = vmul.f32 %v658, %v658
    %v733 = vsub.f32 %v729, %v732
    %v734 = vadd.f32 %v733, 1e-06
    %v735 = vrsqrt.pop %v734
    %v736 = vsub.f32 %v572, %v658
    %v737 = vmul.f32 %v736, %v735
    %v738 = vld [vmem:[%s3] sm:$0x1]
    %v740 = vlaneseq
    %v741 = vshrl.u32 %v740, 7
    %v742 = vsub.s32 0, %v741
    %v743 = vrot.slane %v738, %v742
    %v745 = vmul.f32 %v737, %v743
    %v746 = vld [vmem:[%s4] sm:$0x1]
    %v748 = vlaneseq
    %v749 = vshrl.u32 %v748, 7
    %v750 = vsub.s32 0, %v749
    %v751 = vrot.slane %v746, %v750
    %v753 = vadd.f32 %v745, %v751
    %754 = vst [vmem:[#allocation9] sm:$0xff] %v753
    // Predicated region
    $region34: #{tpu_custom_call.1} parent=1 // pred_check
      _
    $region35: #{tpu_custom_call.1} parent=1 // pred_check_branch
      %756 = sbr.rel (0) target = $region37
    $region36: #{tpu_custom_call.1} parent=1 // pred_region
      %s758 = ssub.s32 128, 128
      %759 = vsyncadd [#allocation5], %s758
      %s761 = sshll.u32 [#allocation9], 4
      %s762 = int_to_ptr.vmem [resolvable:$true] %s761
      %764 = dma.vmem_to_hbm [thread:$0]  %s762, 128, %s5, [#allocation5]
    $region37: #{tpu_custom_call.1} parent=1 // pred_fallthru
      _
    // Predicated region
    $region38: #{tpu_custom_call.1} parent=1 // pred_check
      _
    $region39: #{tpu_custom_call.1} parent=1 // pred_check_branch
      %766 = sbr.rel (0) target = $region41
    $region40: #{tpu_custom_call.1} parent=1 // pred_region
      %767 = dma.done [#allocation5], 128
    $region41: #{tpu_custom_call.1} parent=1 // pred_fallthru
      _
    %768 = vsyncpa [#allocation4], 1
    %769 = vsyncpa [#allocation7], 1
    %770 = vsyncpa [#allocation5], 1

</llo_original>
